<compile_context>
chip_gen: v6e
topology: v6e:2x2x1
jax: 0.10.0
libtpu: 0.0.40
codegen_flags: <defaults>
</compile_context>

<pallas_src>
import functools

import jax
import jax.numpy as jnp
from jax.experimental import pallas as pl
from jax.experimental.pallas import tpu as pltpu


def _round_up(x: int, m: int) -> int:
    return ((x + m - 1) // m) * m


# ------------------------------- glue: im2col -------------------------------

def _im2col(x_nhwc, kh, kw, stride):
    """(N,H,W,C) -> (N*OH*OW, kh*kw*C) patches, tap-major then Cin (matches
    weight flattened as (kh, kw, Cin, Cout))."""
    N, H, W, C = x_nhwc.shape
    OH = (H - kh) // stride + 1
    OW = (W - kw) // stride + 1
    cols = []
    for ki in range(kh):
        for kj in range(kw):
            cols.append(x_nhwc[:, ki:ki + stride * OH:stride,
                               kj:kj + stride * OW:stride, :])
    patches = jnp.concatenate(cols, axis=-1)            # (N, OH, OW, kh*kw*C)
    return patches.reshape(N * OH * OW, kh * kw * C), (N, OH, OW)


# --------------------------- fused Pallas forward ----------------------------

def basic_conv2d_layer(x_nchw, weight_oihw, gamma, beta, *, stride=1,
                       padding=0, eps=1e-3):
    """Conv2d(no bias) -> BatchNorm2d(batch stats, eps, affine) -> ReLU."""
    Cout, Cin, kh, kw = weight_oihw.shape

    # NCHW -> NHWC (+ optional spatial zero padding)
    x = jnp.transpose(x_nchw, (0, 2, 3, 1))
    if padding:
        x = jnp.pad(x, ((0, 0), (padding, padding), (padding, padding), (0, 0)))

    # weights (Cout, Cin, kh, kw) -> (kh, kw, Cin, Cout) -> (K, Cout)
    w2d = jnp.transpose(weight_oihw, (2, 3, 1, 0)).reshape(kh * kw * Cin, Cout)

    patches, (N, OH, OW) = _im2col(x, kh, kw, stride)
    M, K = patches.shape

    # Lane dims (K, Cout) padded to multiples of 128 for unmasked loads/stores
    # and clean MXU tiles. Sublane dim M padded to a multiple of 16 (bf16
    # packing) only. Zero rows / zero channels are statistics-neutral.
    M_pad = _round_up(M, 16)
    K_pad = _round_up(K, 128)
    C_pad = _round_up(Cout, 128)

    a_bf16 = jnp.pad(patches, ((0, M_pad - M), (0, K_pad - K))).astype(jnp.bfloat16)
    w_bf16 = jnp.pad(w2d, ((0, K_pad - K), (0, C_pad - Cout))).astype(jnp.bfloat16)
    g_pad = jnp.pad(gamma.astype(jnp.float32), (0, C_pad - Cout)).reshape(1, C_pad)
    b_pad = jnp.pad(beta.astype(jnp.float32), (0, C_pad - Cout)).reshape(1, C_pad)

    inv_m = 1.0 / float(M)   # true M (padded rows excluded), baked in as const
    eps_f = float(eps)

    def _fused_kernel(a_ref, w_ref, g_ref, b_ref, o_ref):
        # Conv as matmul on the MXU: bf16 operands, f32 accumulation.
        conv = jnp.dot(a_ref[...], w_ref[...],
                       preferred_element_type=jnp.float32)        # (M_pad, C_pad)

        # Training-mode BatchNorm batch statistics (biased variance over the
        # true M = N*OH*OW rows). Padded rows are all-zero so they contribute
        # nothing to sum / sumsq; the divide uses the true M.
        s = jnp.sum(conv, axis=0, keepdims=True)                  # (1, C_pad)
        sq = jnp.sum(conv * conv, axis=0, keepdims=True)          # (1, C_pad)
        mean = s * inv_m
        var = jnp.maximum(sq * inv_m - mean * mean, 0.0)          # clamp cancellation
        scale = g_ref[...] * jax.lax.rsqrt(var + eps_f)           # EUP rsqrt
        bias = b_ref[...] - mean * scale

        # Fused affine-normalize + ReLU; lane-dense (C_pad multiple of 128) store.
        o_ref[...] = jnp.maximum(conv * scale + bias, 0.0)

    cost = pl.CostEstimate(
        flops=2 * M_pad * K_pad * C_pad + 8 * M_pad * C_pad,
        transcendentals=C_pad,
        bytes_accessed=(a_bf16.size * 2 + w_bf16.size * 2
                        + (g_pad.size + b_pad.size) * 4 + M_pad * C_pad * 4),
    )

    y = pl.pallas_call(
        _fused_kernel,
        out_shape=jax.ShapeDtypeStruct((M_pad, C_pad), jnp.float32),
        grid_spec=pltpu.PrefetchScalarGridSpec(
            num_scalar_prefetch=0,
            grid=(1,),  # single step: whole layer resident in VMEM
            in_specs=[pl.BlockSpec((M_pad, K_pad), lambda i: (0, 0)),
                      pl.BlockSpec((K_pad, C_pad), lambda i: (0, 0)),
                      pl.BlockSpec((1, C_pad), lambda i: (0, 0)),
                      pl.BlockSpec((1, C_pad), lambda i: (0, 0))],
            out_specs=pl.BlockSpec((M_pad, C_pad), lambda i: (0, 0)),
        ),
        compiler_params=pltpu.CompilerParams(
            dimension_semantics=("arbitrary",)),
        cost_estimate=cost,
    )(a_bf16, w_bf16, g_pad, b_pad)

    y = y[:M, :Cout].reshape(N, OH, OW, Cout)
    return jnp.transpose(y, (0, 3, 1, 2))                 # NHWC -> NCHW


# ----------------------------- pure-JAX reference ----------------------------

def reference_forward(x_nchw, w_oihw, gamma, beta, *, stride=1, padding=0,
                      eps=1e-3):
    conv = jax.lax.conv_general_dilated(
        x_nchw, w_oihw, window_strides=(stride, stride),
        padding=[(padding, padding), (padding, padding)],
        dimension_numbers=("NCHW", "OIHW", "NCHW"))
    mean = jnp.mean(conv, axis=(0, 2, 3), keepdims=True)
    var = jnp.mean((conv - mean) ** 2, axis=(0, 2, 3), keepdims=True)  # biased
    y = (conv - mean) / jnp.sqrt(var + eps)
    y = y * gamma[None, :, None, None] + beta[None, :, None, None]
    return jnp.maximum(y, 0.0)


# ----------------------------------- main ------------------------------------

if __name__ == "__main__":
    key = jax.random.PRNGKey(0)
    kx, kw, kg, kb = jax.random.split(key, 4)

    # BasicConv2DLayer(input_size=4, output_size=32, kernel_size=3, stride=1)
    N, Cin, H, W = 2, 4, 16, 16
    Cout, ksize, stride, padding = 32, 3, 1, 0

    x = jax.random.normal(kx, (N, Cin, H, W), jnp.float32)
    weight = jax.random.normal(kw, (Cout, Cin, ksize, ksize), jnp.float32) \
        * (2.0 / (Cin * ksize * ksize)) ** 0.5
    gamma = 1.0 + 0.1 * jax.random.normal(kg, (Cout,), jnp.float32)
    beta = 0.1 * jax.random.normal(kb, (Cout,), jnp.float32)

    fwd = jax.jit(functools.partial(basic_conv2d_layer,
                                    stride=stride, padding=padding))
    out = fwd(x, weight, gamma, beta)
    out = jax.block_until_ready(out)

    # 16 -(k3,s1)-> 14 spatial; channels 4 -> 32
    assert out.shape == (N, Cout, 14, 14), out.shape
    assert out.dtype == jnp.float32
    assert bool(jnp.all(out >= 0.0))          # ReLU output
    assert bool(jnp.all(jnp.isfinite(out)))

    # Numerical check vs pure-JAX f32 reference (loose tol: bf16 MXU operands).
    ref = reference_forward(x, weight, gamma, beta,
                            stride=stride, padding=padding)
    max_err = float(jnp.max(jnp.abs(out - ref)))
    assert max_err < 1e-1, max_err

    print("KERNEL_OK")
</pallas_src>

<mosaic_0001>
module attributes {stable_mosaic.version = 11 : i64} {
  func.func @_fused_kernel(%arg0: i32, %arg1: memref<400x128xbf16, #tpu.memory_space<vmem>>, %arg2: memref<128x128xbf16, #tpu.memory_space<vmem>>, %arg3: memref<1x128xf32, #tpu.memory_space<vmem>>, %arg4: memref<1x128xf32, #tpu.memory_space<vmem>>, %arg5: memref<400x128xf32, #tpu.memory_space<vmem>>) attributes {dimension_semantics = [#tpu.dimension_semantics<arbitrary>], iteration_bounds = array<i64: 1>, scalar_prefetch = 0 : i64, scratch_operands = 0 : i64, tpu.core_type = #tpu.core_type<tc>, window_params = [{pipeline_mode = #tpu.pipeline_mode<synchronous>, transform_indices = @transform_0, window_bounds = array<i64: 400, 128>}, {pipeline_mode = #tpu.pipeline_mode<synchronous>, transform_indices = @transform_1, window_bounds = array<i64: 128, 128>}, {pipeline_mode = #tpu.pipeline_mode<synchronous>, transform_indices = @transform_2, window_bounds = array<i64: 1, 128>}, {pipeline_mode = #tpu.pipeline_mode<synchronous>, transform_indices = @transform_3, window_bounds = array<i64: 1, 128>}, {pipeline_mode = #tpu.pipeline_mode<synchronous>, transform_indices = @transform_4, window_bounds = array<i64: 400, 128>}]} {
    %c0 = arith.constant 0 : index
    %c0_0 = arith.constant 0 : index
    %0 = vector.load %arg1[%c0, %c0_0] : memref<400x128xbf16, #tpu.memory_space<vmem>>, vector<400x128xbf16>
    %c0_1 = arith.constant 0 : index
    %c0_2 = arith.constant 0 : index
    %1 = vector.load %arg2[%c0_1, %c0_2] : memref<128x128xbf16, #tpu.memory_space<vmem>>, vector<128x128xbf16>
    %cst = arith.constant dense<0.000000e+00> : vector<400x128xf32>
    %2 = tpu.matmul %0, %1, %cst {dimension_numbers = #tpu.dot_dimension_numbers<[1], [0], [0], [1], [0, 0, 1, 1], [], []>} : vector<400x128xbf16>, vector<128x128xbf16>, vector<400x128xf32> -> vector<400x128xf32>
    %cst_3 = arith.constant dense<0.000000e+00> : vector<128xf32>
    %3 = vector.multi_reduction <add>, %2, %cst_3 [0] : vector<400x128xf32> to vector<128xf32>
    %4 = vector.shape_cast %3 : vector<128xf32> to vector<1x128xf32>
    %5 = arith.mulf %2, %2 : vector<400x128xf32>
    %cst_4 = arith.constant dense<0.000000e+00> : vector<128xf32>
    %6 = vector.multi_reduction <add>, %5, %cst_4 [0] : vector<400x128xf32> to vector<128xf32>
    %7 = vector.shape_cast %6 : vector<128xf32> to vector<1x128xf32>
    %cst_5 = arith.constant 0.00255102036 : f32
    %8 = vector.broadcast %cst_5 : f32 to vector<1x128xf32>
    %9 = arith.mulf %4, %8 : vector<1x128xf32>
    %cst_6 = arith.constant 0.00255102036 : f32
    %10 = vector.broadcast %cst_6 : f32 to vector<1x128xf32>
    %11 = arith.mulf %7, %10 : vector<1x128xf32>
    %12 = arith.mulf %9, %9 : vector<1x128xf32>
    %13 = arith.subf %11, %12 : vector<1x128xf32>
    %cst_7 = arith.constant 0.000000e+00 : f32
    %14 = vector.broadcast %cst_7 : f32 to vector<1x128xf32>
    %15 = arith.maximumf %13, %14 : vector<1x128xf32>
    %c0_8 = arith.constant 0 : index
    %c0_9 = arith.constant 0 : index
    %16 = vector.load %arg3[%c0_8, %c0_9] : memref<1x128xf32, #tpu.memory_space<vmem>>, vector<1x128xf32>
    %cst_10 = arith.constant 1.000000e-03 : f32
    %17 = vector.broadcast %cst_10 : f32 to vector<1x128xf32>
    %18 = arith.addf %15, %17 : vector<1x128xf32>
    %19 = math.rsqrt %18 : vector<1x128xf32>
    %20 = arith.mulf %16, %19 : vector<1x128xf32>
    %c0_11 = arith.constant 0 : index
    %c0_12 = arith.constant 0 : index
    %21 = vector.load %arg4[%c0_11, %c0_12] : memref<1x128xf32, #tpu.memory_space<vmem>>, vector<1x128xf32>
    %22 = arith.mulf %9, %20 : vector<1x128xf32>
    %23 = arith.subf %21, %22 : vector<1x128xf32>
    %24 = vector.broadcast %20 : vector<1x128xf32> to vector<400x128xf32>
    %25 = arith.mulf %2, %24 : vector<400x128xf32>
    %26 = vector.broadcast %23 : vector<1x128xf32> to vector<400x128xf32>
    %27 = arith.addf %25, %26 : vector<400x128xf32>
    %cst_13 = arith.constant 0.000000e+00 : f32
    %28 = vector.broadcast %cst_13 : f32 to vector<400x128xf32>
    %29 = arith.maximumf %27, %28 : vector<400x128xf32>
    %c0_14 = arith.constant 0 : index
    %c0_15 = arith.constant 0 : index
    %30 = vector.load %arg5[%c0_14, %c0_15] : memref<400x128xf32, #tpu.memory_space<vmem>>, vector<400x128xf32>
    tpu.vector_store %arg5[%c0_14, %c0_15], %29 {strides = array<i32>} : memref<400x128xf32, #tpu.memory_space<vmem>>, vector<400x128xf32>,
    return
  }
  func.func @transform_0(%arg0: i32) -> (i32, i32) {
    %c0_i32 = arith.constant 0 : i32
    %c0_i32_0 = arith.constant 0 : i32
    %c0_i32_1 = arith.constant 0 : i32
    return %c0_i32, %c0_i32_0 : i32, i32
  }
  func.func @transform_1(%arg0: i32) -> (i32, i32) {
    %c0_i32 = arith.constant 0 : i32
    %c0_i32_0 = arith.constant 0 : i32
    %c0_i32_1 = arith.constant 0 : i32
    return %c0_i32, %c0_i32_0 : i32, i32
  }
  func.func @transform_2(%arg0: i32) -> (i32, i32) {
    %c0_i32 = arith.constant 0 : i32
    %c0_i32_0 = arith.constant 0 : i32
    %c0_i32_1 = arith.constant 0 : i32
    return %c0_i32, %c0_i32_0 : i32, i32
  }
  func.func @transform_3(%arg0: i32) -> (i32, i32) {
    %c0_i32 = arith.constant 0 : i32
    %c0_i32_0 = arith.constant 0 : i32
    %c0_i32_1 = arith.constant 0 : i32
    return %c0_i32, %c0_i32_0 : i32, i32
  }
  func.func @transform_4(%arg0: i32) -> (i32, i32) {
    %c0_i32 = arith.constant 0 : i32
    %c0_i32_0 = arith.constant 0 : i32
    %c0_i32_1 = arith.constant 0 : i32
    return %c0_i32, %c0_i32_0 : i32, i32
  }
}

</mosaic_0001>

<llo_original>
// kernel: basic_conv2d_layer.1
$region0: #{basic_conv2d_layer.1}
  #allocation0 [shape = 'u32[]', space=smem, size = 0x4, offset = 0x4, fixed_abs, tag = 'smem constant byte address 0x4 - core index']
  #allocation1 [shape = 'u32[144,128]{1,0:T(1,128)}', space=vmem, size = 0x12000, scoped, tag = 'internal scratch']
  %s0 = inlined_call_operand.vmem [shape: bf16[400,128], index: 0, kind: input, shape index: {}]
  %s1 = inlined_call_operand.vmem [shape: bf16[128,128], index: 1, kind: input, shape index: {}]
  %s2 = inlined_call_operand.vmem [shape: f32[1,128], index: 2, kind: input, shape index: {}]
  %s3 = inlined_call_operand.vmem [shape: f32[1,128], index: 3, kind: input, shape index: {}]
  %s4 = inlined_call_operand.vmem [shape: f32[400,128], index: 4, kind: output, shape index: {}]
  %s5 = sld [smem:[#allocation0]]
  $region26: #{basic_conv2d_layer.1} parent=0
    _
  %s7 = ssub.s32 1, %s5
  %s8 = scalar_select 0, %s7, %s5
  // Predicated region
  $region2: #{basic_conv2d_layer.1} parent=0 // pred_check
    _
  $region3: #{basic_conv2d_layer.1} parent=0 // pred_check_branch
    %10 = sbr.rel (0) target = $region5
  $region4: #{basic_conv2d_layer.1} parent=0 // pred_region
    _
  $region5: #{basic_conv2d_layer.1} parent=0 // pred_fallthru
    _
  // Predicated region
  $region6: #{basic_conv2d_layer.1} parent=0 // pred_check
    _
  $region7: #{basic_conv2d_layer.1} parent=0 // pred_check_branch
    %12 = sbr.rel (0) target = $region9
  $region8: #{basic_conv2d_layer.1} parent=0 // pred_region
    _
  $region9: #{basic_conv2d_layer.1} parent=0 // pred_fallthru
    _
  // Predicated region
  $region10: #{basic_conv2d_layer.1} parent=0 // pred_check
    _
  $region11: #{basic_conv2d_layer.1} parent=0 // pred_check_branch
    %14 = sbr.rel (0) target = $region13
  $region12: #{basic_conv2d_layer.1} parent=0 // pred_region
    _
  $region13: #{basic_conv2d_layer.1} parent=0 // pred_fallthru
    _
  // Predicated region
  $region14: #{basic_conv2d_layer.1} parent=0 // pred_check
    _
  $region15: #{basic_conv2d_layer.1} parent=0 // pred_check_branch
    %16 = sbr.rel (0) target = $region17
  $region16: #{basic_conv2d_layer.1} parent=0 // pred_region
    _
  $region17: #{basic_conv2d_layer.1} parent=0 // pred_fallthru
    _
  %v18 = vld [vmem:[%s0] sm:$0xf]
  %v19 = vld [vmem:[%s0 + $0x4] sm:$0xf]
  %v20 = vld [vmem:[%s0 + $0x8] sm:$0xf]
  %v21 = vld [vmem:[%s0 + $0xc] sm:$0xf]
  %v22 = vld [vmem:[%s0 + $0x10] sm:$0xf]
  %v23 = vld [vmem:[%s0 + $0x14] sm:$0xf]
  %v24 = vld [vmem:[%s0 + $0x18] sm:$0xf]
  %v25 = vld [vmem:[%s0 + $0x1c] sm:$0xf]
  %v26 = vld [vmem:[%s0 + $0x20] sm:$0xf]
  %v27 = vld [vmem:[%s0 + $0x24] sm:$0xf]
  %v28 = vld [vmem:[%s0 + $0x28] sm:$0xf]
  %v29 = vld [vmem:[%s0 + $0x2c] sm:$0xf]
  %v30 = vld [vmem:[%s0 + $0x30] sm:$0xf]
  %v31 = vld [vmem:[%s0 + $0x34] sm:$0xf]
  %v32 = vld [vmem:[%s0 + $0x38] sm:$0xf]
  %v33 = vld [vmem:[%s0 + $0x3c] sm:$0xf]
  %v34 = vld [vmem:[%s0 + $0x40] sm:$0xf]
  %v35 = vld [vmem:[%s0 + $0x44] sm:$0xf]
  %v36 = vld [vmem:[%s0 + $0x48] sm:$0xf]
  %v37 = vld [vmem:[%s0 + $0x4c] sm:$0xf]
  %v38 = vld [vmem:[%s0 + $0x50] sm:$0xf]
  %v39 = vld [vmem:[%s0 + $0x54] sm:$0xf]
  %v40 = vld [vmem:[%s0 + $0x58] sm:$0xf]
  %v41 = vld [vmem:[%s0 + $0x5c] sm:$0xf]
  %v42 = vld [vmem:[%s0 + $0x60] sm:$0xf]
  %v43 = vld [vmem:[%s0 + $0x64] sm:$0xf]
  %v44 = vld [vmem:[%s0 + $0x68] sm:$0xf]
  %v45 = vld [vmem:[%s0 + $0x6c] sm:$0xf]
  %v46 = vld [vmem:[%s0 + $0x70] sm:$0xf]
  %v47 = vld [vmem:[%s0 + $0x74] sm:$0xf]
  %v48 = vld [vmem:[%s0 + $0x78] sm:$0xf]
  %v49 = vld [vmem:[%s0 + $0x7c] sm:$0xf]
  %v50 = vld [vmem:[%s0 + $0x80] sm:$0xf]
  %v51 = vld [vmem:[%s0 + $0x84] sm:$0xf]
  %v52 = vld [vmem:[%s0 + $0x88] sm:$0xf]
  %v53 = vld [vmem:[%s0 + $0x8c] sm:$0xf]
  %v54 = vld [vmem:[%s0 + $0x90] sm:$0xf]
  %v55 = vld [vmem:[%s0 + $0x94] sm:$0xf]
  %v56 = vld [vmem:[%s0 + $0x98] sm:$0xf]
  %v57 = vld [vmem:[%s0 + $0x9c] sm:$0xf]
  %v58 = vld [vmem:[%s0 + $0xa0] sm:$0xf]
  %v59 = vld [vmem:[%s0 + $0xa4] sm:$0xf]
  %v60 = vld [vmem:[%s0 + $0xa8] sm:$0xf]
  %v61 = vld [vmem:[%s0 + $0xac] sm:$0xf]
  %v62 = vld [vmem:[%s0 + $0xb0] sm:$0xf]
  %v63 = vld [vmem:[%s0 + $0xb4] sm:$0xf]
  %v64 = vld [vmem:[%s0 + $0xb8] sm:$0xf]
  %v65 = vld [vmem:[%s0 + $0xbc] sm:$0xf]
  %v66 = vld [vmem:[%s0 + $0xc0] sm:$0xf]
  %v67 = vld [vmem:[%s0 + $0xc4] sm:$0xf]
  %v68 = vld [vmem:[%s1] sm:$0xf]
  %v69 = vld [vmem:[%s1 + $0x4] sm:$0xf]
  %v70 = vld [vmem:[%s1 + $0x8] sm:$0xf]
  %v71 = vld [vmem:[%s1 + $0xc] sm:$0xf]
  %v72 = vld [vmem:[%s1 + $0x10] sm:$0xf]
  %v73 = vld [vmem:[%s1 + $0x14] sm:$0xf]
  %v74 = vld [vmem:[%s1 + $0x18] sm:$0xf]
  %v75 = vld [vmem:[%s1 + $0x1c] sm:$0xf]
  %v76 = vld [vmem:[%s1 + $0x20] sm:$0xf]
  %v77 = vld [vmem:[%s1 + $0x24] sm:$0xf]
  %v78 = vld [vmem:[%s1 + $0x28] sm:$0xf]
  %v79 = vld [vmem:[%s1 + $0x2c] sm:$0xf]
  %v80 = vld [vmem:[%s1 + $0x30] sm:$0xf]
  %v81 = vld [vmem:[%s1 + $0x34] sm:$0xf]
  %v82 = vld [vmem:[%s1 + $0x38] sm:$0xf]
  %v83 = vld [vmem:[%s1 + $0x3c] sm:$0xf]
  %v134 = vunpack.c.l.b16 %v18
  %v135 = vunpack.c.l.b16 %v19
  %v136 = vunpack.c.l.b16 %v20
  %v137 = vunpack.c.l.b16 %v21
  %v138 = vunpack.c.l.b16 %v22
  %v139 = vunpack.c.l.b16 %v23
  %v140 = vunpack.c.l.b16 %v24
  %v141 = vunpack.c.l.b16 %v25
  %v142 = vunpack.c.l.b16 %v26
  %v143 = vunpack.c.l.b16 %v27
  %v144 = vunpack.c.l.b16 %v28
  %v145 = vunpack.c.l.b16 %v29
  %v146 = vunpack.c.l.b16 %v30
  %v147 = vunpack.c.l.b16 %v31
  %v148 = vunpack.c.l.b16 %v32
  %v149 = vunpack.c.l.b16 %v33
  %v150 = vunpack.c.l.b16 %v34
  %v151 = vunpack.c.l.b16 %v35
  %v152 = vunpack.c.l.b16 %v36
  %v153 = vunpack.c.l.b16 %v37
  %v154 = vunpack.c.l.b16 %v38
  %v155 = vunpack.c.l.b16 %v39
  %v156 = vunpack.c.l.b16 %v40
  %v157 = vunpack.c.l.b16 %v41
  %v158 = vunpack.c.l.b16 %v42
  %v159 = vunpack.c.l.b16 %v43
  %v160 = vunpack.c.l.b16 %v44
  %v161 = vunpack.c.l.b16 %v45
  %v162 = vunpack.c.l.b16 %v46
  %v163 = vunpack.c.l.b16 %v47
  %v164 = vunpack.c.l.b16 %v48
  %v165 = vunpack.c.l.b16 %v49
  %v166 = vunpack.c.l.b16 %v50
  %v167 = vunpack.c.l.b16 %v51
  %v168 = vunpack.c.l.b16 %v52
  %v169 = vunpack.c.l.b16 %v53
  %v170 = vunpack.c.l.b16 %v54
  %v171 = vunpack.c.l.b16 %v55
  %v172 = vunpack.c.l.b16 %v56
  %v173 = vunpack.c.l.b16 %v57
  %v174 = vunpack.c.l.b16 %v58
  %v175 = vunpack.c.l.b16 %v59
  %v176 = vunpack.c.l.b16 %v60
  %v177 = vunpack.c.l.b16 %v61
  %v178 = vunpack.c.l.b16 %v62
  %v179 = vunpack.c.l.b16 %v63
  %v180 = vunpack.c.l.b16 %v64
  %v181 = vunpack.c.l.b16 %v65
  %v182 = vunpack.c.l.b16 %v66
  %v183 = vunpack.c.l.b16 %v67
  %v184 = vpack.c.b16 %v135, %v134
  %v185 = vpack.c.b16 %v137, %v136
  %v186 = vpack.c.b16 %v139, %v138
  %v187 = vpack.c.b16 %v141, %v140
  %v188 = vpack.c.b16 %v143, %v142
  %v189 = vpack.c.b16 %v145, %v144
  %v190 = vpack.c.b16 %v147, %v146
  %v191 = vpack.c.b16 %v149, %v148
  %v192 = vpack.c.b16 %v151, %v150
  %v193 = vpack.c.b16 %v153, %v152
  %v194 = vpack.c.b16 %v155, %v154
  %v195 = vpack.c.b16 %v157, %v156
  %v196 = vpack.c.b16 %v159, %v158
  %v197 = vpack.c.b16 %v161, %v160
  %v198 = vpack.c.b16 %v163, %v162
  %v199 = vpack.c.b16 %v165, %v164
  %v200 = vpack.c.b16 %v167, %v166
  %v201 = vpack.c.b16 %v169, %v168
  %v202 = vpack.c.b16 %v171, %v170
  %v203 = vpack.c.b16 %v173, %v172
  %v204 = vpack.c.b16 %v175, %v174
  %v205 = vpack.c.b16 %v177, %v176
  %v206 = vpack.c.b16 %v179, %v178
  %v207 = vpack.c.b16 %v181, %v180
  %v208 = vpack.c.b16 %v183, %v182
  %v250 = vunpack.c.l.b16 %v68
  %v251 = vunpack.c.l.b16 %v69
  %v252 = vunpack.c.l.b16 %v70
  %v253 = vunpack.c.l.b16 %v71
  %v254 = vunpack.c.l.b16 %v72
  %v255 = vunpack.c.l.b16 %v73
  %v256 = vunpack.c.l.b16 %v74
  %v257 = vunpack.c.l.b16 %v75
  %v258 = vunpack.c.l.b16 %v76
  %v259 = vunpack.c.l.b16 %v77
  %v260 = vunpack.c.l.b16 %v78
  %v261 = vunpack.c.l.b16 %v79
  %v262 = vunpack.c.l.b16 %v80
  %v263 = vunpack.c.l.b16 %v81
  %v264 = vunpack.c.l.b16 %v82
  %v265 = vunpack.c.l.b16 %v83
  %v266 = vpack.c.b16 %v251, %v250
  %v267 = vpack.c.b16 %v253, %v252
  %v268 = vpack.c.b16 %v255, %v254
  %v269 = vpack.c.b16 %v257, %v256
  %v270 = vpack.c.b16 %v259, %v258
  %v271 = vpack.c.b16 %v261, %v260
  %v272 = vpack.c.b16 %v263, %v262
  %v273 = vpack.c.b16 %v265, %v264
  %282 = vmatprep.subr.bf16.mxu0 0
  %283 = vmatpush1.bf16.msra.mxu0 %v273
  %284 = vmatprep.subr.bf16.mxu0 0
  %285 = vmatpush1.bf16.msra.mxu0 %v272
  %286 = vmatprep.subr.bf16.mxu0 0
  %287 = vmatpush1.bf16.msra.mxu0 %v271
  %288 = vmatprep.subr.bf16.mxu0 0
  %289 = vmatpush1.bf16.msra.mxu0 %v270
  %290 = vmatprep.subr.bf16.mxu0 0
  %291 = vmatpush1.bf16.msra.mxu0 %v269
  %292 = vmatprep.subr.bf16.mxu0 0
  %293 = vmatpush1.bf16.msra.mxu0 %v268
  %294 = vmatprep.subr.bf16.mxu0 0
  %295 = vmatpush1.bf16.msra.mxu0 %v267
  %296 = vmatprep.subr.bf16.mxu0 0
  %297 = vmatpush1.bf16.msra.mxu0 %v266
  %298 = vmatprep.subr.bf16.mxu0 0
  %299 = vmatpush2.bf16.msra.mxu0 0
  %300 = vmatprep.subr.bf16.mxu0 0
  %301 = vmatpush2.bf16.msra.mxu0 0
  %302 = vmatprep.subr.bf16.mxu0 0
  %303 = vmatpush2.bf16.msra.mxu0 0
  %304 = vmatprep.subr.bf16.mxu0 0
  %305 = vmatpush2.bf16.msra.mxu0 0
  %306 = vmatprep.subr.bf16.mxu0 0
  %307 = vmatpush2.bf16.msra.mxu0 0
  %308 = vmatprep.subr.bf16.mxu0 0
  %309 = vmatpush2.bf16.msra.mxu0 0
  %310 = vmatprep.subr.bf16.mxu0 0
  %311 = vmatpush2.bf16.msra.mxu0 0
  %312 = vmatprep.subr.bf16.mxu0 0
  %313 = vmatpush2.bf16.msra.mxu0 0
  %314 = vmatprep.mubr.bf16.mxu0 0
  %315 = vmatmul.mubr.bf16.gmra.mxu0 %v184
  %v316 = vpop.f32.mrf.mxu0
  %v317 = vadd.f32 0.0, %v316
  %v318 = vpop.f32.mrf.mxu0
  %v319 = vpop.f32.mrf.mxu0
  %v320 = vadd.f32 0.0, %v319
  %v321 = vpop.f32.mrf.mxu0
  %322 = vmatprep.mubr.bf16.mxu0 0
  %323 = vmatmul.mubr.bf16.gmra.mxu0 %v185
  %v324 = vpop.f32.mrf.mxu0
  %v325 = vadd.f32 0.0, %v324
  %v326 = vpop.f32.mrf.mxu0
  %v327 = vpop.f32.mrf.mxu0
  %v328 = vadd.f32 0.0, %v327
  %v329 = vpop.f32.mrf.mxu0
  %330 = vmatprep.mubr.bf16.mxu0 0
  %331 = vmatmul.mubr.bf16.gmra.mxu0 %v186
  %v332 = vpop.f32.mrf.mxu0
  %v333 = vadd.f32 0.0, %v332
  %v334 = vpop.f32.mrf.mxu0
  %v335 = vpop.f32.mrf.mxu0
  %v336 = vadd.f32 0.0, %v335
  %v337 = vpop.f32.mrf.mxu0
  %338 = vmatprep.mubr.bf16.mxu0 0
  %339 = vmatmul.mubr.bf16.gmra.mxu0 %v187
  %v340 = vpop.f32.mrf.mxu0
  %v341 = vadd.f32 0.0, %v340
  %v342 = vpop.f32.mrf.mxu0
  %v343 = vpop.f32.mrf.mxu0
  %v344 = vadd.f32 0.0, %v343
  %v345 = vpop.f32.mrf.mxu0
  %346 = vmatprep.mubr.bf16.mxu0 0
  %347 = vmatmul.mubr.bf16.gmra.mxu0 %v188
  %v348 = vpop.f32.mrf.mxu0
  %v349 = vadd.f32 0.0, %v348
  %v350 = vpop.f32.mrf.mxu0
  %v351 = vpop.f32.mrf.mxu0
  %v352 = vadd.f32 0.0, %v351
  %v353 = vpop.f32.mrf.mxu0
  %354 = vmatprep.mubr.bf16.mxu0 0
  %355 = vmatmul.mubr.bf16.gmra.mxu0 %v189
  %v356 = vpop.f32.mrf.mxu0
  %v357 = vadd.f32 0.0, %v356
  %v358 = vpop.f32.mrf.mxu0
  %v359 = vpop.f32.mrf.mxu0
  %v360 = vadd.f32 0.0, %v359
  %v361 = vpop.f32.mrf.mxu0
  %362 = vmatprep.mubr.bf16.mxu0 0
  %363 = vmatmul.mubr.bf16.gmra.mxu0 %v190
  %v364 = vpop.f32.mrf.mxu0
  %v365 = vadd.f32 0.0, %v364
  %v366 = vpop.f32.mrf.mxu0
  %v367 = vpop.f32.mrf.mxu0
  %v368 = vadd.f32 0.0, %v367
  %v369 = vpop.f32.mrf.mxu0
  %370 = vmatprep.mubr.bf16.mxu0 0
  %371 = vmatmul.mubr.bf16.gmra.mxu0 %v191
  %v372 = vpop.f32.mrf.mxu0
  %v373 = vadd.f32 0.0, %v372
  %v374 = vpop.f32.mrf.mxu0
  %v375 = vpop.f32.mrf.mxu0
  %v376 = vadd.f32 0.0, %v375
  %v377 = vpop.f32.mrf.mxu0
  %378 = vmatprep.mubr.bf16.mxu0 0
  %379 = vmatmul.mubr.bf16.gmra.mxu0 %v192
  %v380 = vpop.f32.mrf.mxu0
  %v381 = vadd.f32 0.0, %v380
  %v382 = vpop.f32.mrf.mxu0
  %v383 = vpop.f32.mrf.mxu0
  %v384 = vadd.f32 0.0, %v383
  %v385 = vpop.f32.mrf.mxu0
  %386 = vmatprep.mubr.bf16.mxu0 0
  %387 = vmatmul.mubr.bf16.gmra.mxu0 %v193
  %v388 = vpop.f32.mrf.mxu0
  %v389 = vadd.f32 0.0, %v388
  %v390 = vpop.f32.mrf.mxu0
  %v391 = vpop.f32.mrf.mxu0
  %v392 = vadd.f32 0.0, %v391
  %v393 = vpop.f32.mrf.mxu0
  %394 = vmatprep.mubr.bf16.mxu0 0
  %395 = vmatmul.mubr.bf16.gmra.mxu0 %v194
  %v396 = vpop.f32.mrf.mxu0
  %v397 = vadd.f32 0.0, %v396
  %v398 = vpop.f32.mrf.mxu0
  %v399 = vpop.f32.mrf.mxu0
  %v400 = vadd.f32 0.0, %v399
  %v401 = vpop.f32.mrf.mxu0
  %402 = vmatprep.mubr.bf16.mxu0 0
  %403 = vmatmul.mubr.bf16.gmra.mxu0 %v195
  %v404 = vpop.f32.mrf.mxu0
  %v405 = vadd.f32 0.0, %v404
  %v406 = vpop.f32.mrf.mxu0
  %v407 = vpop.f32.mrf.mxu0
  %v408 = vadd.f32 0.0, %v407
  %v409 = vpop.f32.mrf.mxu0
  %410 = vmatprep.mubr.bf16.mxu0 0
  %411 = vmatmul.mubr.bf16.gmra.mxu0 %v196
  %v412 = vpop.f32.mrf.mxu0
  %v413 = vadd.f32 0.0, %v412
  %v414 = vpop.f32.mrf.mxu0
  %v415 = vpop.f32.mrf.mxu0
  %v416 = vadd.f32 0.0, %v415
  %v417 = vpop.f32.mrf.mxu0
  %418 = vmatprep.mubr.bf16.mxu0 0
  %419 = vmatmul.mubr.bf16.gmra.mxu0 %v197
  %v420 = vpop.f32.mrf.mxu0
  %v421 = vadd.f32 0.0, %v420
  %v422 = vpop.f32.mrf.mxu0
  %v423 = vpop.f32.mrf.mxu0
  %v424 = vadd.f32 0.0, %v423
  %v425 = vpop.f32.mrf.mxu0
  %426 = vmatprep.mubr.bf16.mxu0 0
  %427 = vmatmul.mubr.bf16.gmra.mxu0 %v198
  %v428 = vpop.f32.mrf.mxu0
  %v429 = vadd.f32 0.0, %v428
  %v430 = vpop.f32.mrf.mxu0
  %v431 = vpop.f32.mrf.mxu0
  %v432 = vadd.f32 0.0, %v431
  %v433 = vpop.f32.mrf.mxu0
  %434 = vmatprep.mubr.bf16.mxu0 0
  %435 = vmatmul.mubr.bf16.gmra.mxu0 %v199
  %v436 = vpop.f32.mrf.mxu0
  %v437 = vadd.f32 0.0, %v436
  %v438 = vpop.f32.mrf.mxu0
  %v439 = vpop.f32.mrf.mxu0
  %v440 = vadd.f32 0.0, %v439
  %v441 = vpop.f32.mrf.mxu0
  %442 = vmatprep.mubr.bf16.mxu0 0
  %443 = vmatmul.mubr.bf16.gmra.mxu0 %v200
  %v444 = vpop.f32.mrf.mxu0
  %v445 = vadd.f32 0.0, %v444
  %v446 = vpop.f32.mrf.mxu0
  %v447 = vpop.f32.mrf.mxu0
  %v448 = vadd.f32 0.0, %v447
  %v449 = vpop.f32.mrf.mxu0
  %450 = vmatprep.mubr.bf16.mxu0 0
  %451 = vmatmul.mubr.bf16.gmra.mxu0 %v201
  %v452 = vpop.f32.mrf.mxu0
  %v453 = vadd.f32 0.0, %v452
  %v454 = vpop.f32.mrf.mxu0
  %v455 = vpop.f32.mrf.mxu0
  %v456 = vadd.f32 0.0, %v455
  %v457 = vpop.f32.mrf.mxu0
  %458 = vmatprep.mubr.bf16.mxu0 0
  %459 = vmatmul.mubr.bf16.gmra.mxu0 %v202
  %v460 = vpop.f32.mrf.mxu0
  %v461 = vadd.f32 0.0, %v460
  %v462 = vpop.f32.mrf.mxu0
  %v463 = vpop.f32.mrf.mxu0
  %v464 = vadd.f32 0.0, %v463
  %v465 = vpop.f32.mrf.mxu0
  %466 = vmatprep.mubr.bf16.mxu0 0
  %467 = vmatmul.mubr.bf16.gmra.mxu0 %v203
  %v468 = vpop.f32.mrf.mxu0
  %v469 = vadd.f32 0.0, %v468
  %v470 = vpop.f32.mrf.mxu0
  %v471 = vpop.f32.mrf.mxu0
  %v472 = vadd.f32 0.0, %v471
  %v473 = vpop.f32.mrf.mxu0
  %474 = vmatprep.mubr.bf16.mxu0 0
  %475 = vmatmul.mubr.bf16.gmra.mxu0 %v204
  %v476 = vpop.f32.mrf.mxu0
  %v477 = vadd.f32 0.0, %v476
  %v478 = vpop.f32.mrf.mxu0
  %v479 = vpop.f32.mrf.mxu0
  %v480 = vadd.f32 0.0, %v479
  %v481 = vpop.f32.mrf.mxu0
  %482 = vmatprep.mubr.bf16.mxu0 0
  %483 = vmatmul.mubr.bf16.gmra.mxu0 %v205
  %v484 = vpop.f32.mrf.mxu0
  %v485 = vadd.f32 0.0, %v484
  %v486 = vpop.f32.mrf.mxu0
  %v487 = vpop.f32.mrf.mxu0
  %v488 = vadd.f32 0.0, %v487
  %v489 = vpop.f32.mrf.mxu0
  %490 = vmatprep.mubr.bf16.mxu0 0
  %491 = vmatmul.mubr.bf16.gmra.mxu0 %v206
  %v492 = vpop.f32.mrf.mxu0
  %v493 = vadd.f32 0.0, %v492
  %v494 = vpop.f32.mrf.mxu0
  %v495 = vpop.f32.mrf.mxu0
  %v496 = vadd.f32 0.0, %v495
  %v497 = vpop.f32.mrf.mxu0
  %498 = vmatprep.mubr.bf16.mxu0 0
  %499 = vmatmul.mubr.bf16.gmra.mxu0 %v207
  %v500 = vpop.f32.mrf.mxu0
  %v501 = vadd.f32 0.0, %v500
  %v502 = vpop.f32.mrf.mxu0
  %v503 = vpop.f32.mrf.mxu0
  %v504 = vadd.f32 0.0, %v503
  %v505 = vpop.f32.mrf.mxu0
  %506 = vmatprep.mubr.bf16.mxu0 0
  %507 = vmatmul.mubr.bf16.gmra.mxu0 %v208
  %v508 = vpop.f32.mrf.mxu0
  %v509 = vadd.f32 0.0, %v508
  %v510 = vpop.f32.mrf.mxu0
  %v511 = vpop.f32.mrf.mxu0
  %v512 = vadd.f32 0.0, %v511
  %v513 = vpop.f32.mrf.mxu0
  %514 = vdwg.mxu0
  %v515 = vadd.f32 %v317, %v320
  %v516 = vadd.f32 %v515, %v325
  %v517 = vadd.f32 %v516, %v328
  %v518 = vadd.f32 %v517, %v333
  %v519 = vadd.f32 %v518, %v336
  %v520 = vadd.f32 %v519, %v341
  %v521 = vadd.f32 %v520, %v344
  %v522 = vadd.f32 %v521, %v349
  %v523 = vadd.f32 %v522, %v352
  %v524 = vadd.f32 %v523, %v357
  %v525 = vadd.f32 %v524, %v360
  %v526 = vadd.f32 %v525, %v365
  %v527 = vadd.f32 %v526, %v368
  %v528 = vadd.f32 %v527, %v373
  %v529 = vadd.f32 %v528, %v376
  %v530 = vadd.f32 %v529, %v381
  %v531 = vadd.f32 %v530, %v384
  %v532 = vadd.f32 %v531, %v389
  %v533 = vadd.f32 %v532, %v392
  %v534 = vadd.f32 %v533, %v397
  %v535 = vadd.f32 %v534, %v400
  %v536 = vadd.f32 %v535, %v405
  %v537 = vadd.f32 %v536, %v408
  %v538 = vadd.f32 %v537, %v413
  %v539 = vadd.f32 %v538, %v416
  %v540 = vadd.f32 %v539, %v421
  %v541 = vadd.f32 %v540, %v424
  %v542 = vadd.f32 %v541, %v429
  %v543 = vadd.f32 %v542, %v432
  %v544 = vadd.f32 %v543, %v437
  %v545 = vadd.f32 %v544, %v440
  %v546 = vadd.f32 %v545, %v445
  %v547 = vadd.f32 %v546, %v448
  %v548 = vadd.f32 %v547, %v453
  %v549 = vadd.f32 %v548, %v456
  %v550 = vadd.f32 %v549, %v461
  %v551 = vadd.f32 %v550, %v464
  %v552 = vadd.f32 %v551, %v469
  %v553 = vadd.f32 %v552, %v472
  %v554 = vadd.f32 %v553, %v477
  %v555 = vadd.f32 %v554, %v480
  %v556 = vadd.f32 %v555, %v485
  %v557 = vadd.f32 %v556, %v488
  %v558 = vadd.f32 %v557, %v493
  %v559 = vadd.f32 %v558, %v496
  %v560 = vadd.f32 %v559, %v501
  %v561 = vadd.f32 %v560, %v504
  %v562 = vadd.f32 %v561, %v509
  %v563 = vadd.f32 %v562, %v512
  %v564 = vrot.slane %v563, 4
  %v565 = vadd.f32 %v563, %v564
  %v566 = vrot.slane %v565, 2
  %v567 = vadd.f32 %v565, %v566
  %v568 = vrot.slane %v567, 1
  %v569 = vadd.f32 %v567, %v568
  %v570 = vmul.f32 %v317, %v317
  %v571 = vmul.f32 %v320, %v320
  %v572 = vmul.f32 %v325, %v325
  %v573 = vmul.f32 %v328, %v328
  %v574 = vmul.f32 %v333, %v333
  %v575 = vmul.f32 %v336, %v336
  %v576 = vmul.f32 %v341, %v341
  %v577 = vmul.f32 %v344, %v344
  %v578 = vmul.f32 %v349, %v349
  %v579 = vmul.f32 %v352, %v352
  %v580 = vmul.f32 %v357, %v357
  %v581 = vmul.f32 %v360, %v360
  %v582 = vmul.f32 %v365, %v365
  %v583 = vmul.f32 %v368, %v368
  %v584 = vmul.f32 %v373, %v373
  %v585 = vmul.f32 %v376, %v376
  %v586 = vmul.f32 %v381, %v381
  %v587 = vmul.f32 %v384, %v384
  %v588 = vmul.f32 %v389, %v389
  %v589 = vmul.f32 %v392, %v392
  %v590 = vmul.f32 %v397, %v397
  %v591 = vmul.f32 %v400, %v400
  %v592 = vmul.f32 %v405, %v405
  %v593 = vmul.f32 %v408, %v408
  %v594 = vmul.f32 %v413, %v413
  %v595 = vmul.f32 %v416, %v416
  %v596 = vmul.f32 %v421, %v421
  %v597 = vmul.f32 %v424, %v424
  %v598 = vmul.f32 %v429, %v429
  %v599 = vmul.f32 %v432, %v432
  %v600 = vmul.f32 %v437, %v437
  %v601 = vmul.f32 %v440, %v440
  %v602 = vmul.f32 %v445, %v445
  %v603 = vmul.f32 %v448, %v448
  %v604 = vmul.f32 %v453, %v453
  %v605 = vmul.f32 %v456, %v456
  %v606 = vmul.f32 %v461, %v461
  %v607 = vmul.f32 %v464, %v464
  %v608 = vmul.f32 %v469, %v469
  %v609 = vmul.f32 %v472, %v472
  %v610 = vmul.f32 %v477, %v477
  %v611 = vmul.f32 %v480, %v480
  %v612 = vmul.f32 %v485, %v485
  %v613 = vmul.f32 %v488, %v488
  %v614 = vmul.f32 %v493, %v493
  %v615 = vmul.f32 %v496, %v496
  %v616 = vmul.f32 %v501, %v501
  %v617 = vmul.f32 %v504, %v504
  %v618 = vmul.f32 %v509, %v509
  %v619 = vmul.f32 %v512, %v512
  %v620 = vadd.f32 %v570, %v571
  %v621 = vadd.f32 %v620, %v572
  %v622 = vadd.f32 %v621, %v573
  %v623 = vadd.f32 %v622, %v574
  %v624 = vadd.f32 %v623, %v575
  %v625 = vadd.f32 %v624, %v576
  %v626 = vadd.f32 %v625, %v577
  %v627 = vadd.f32 %v626, %v578
  %v628 = vadd.f32 %v627, %v579
  %v629 = vadd.f32 %v628, %v580
  %v630 = vadd.f32 %v629, %v581
  %v631 = vadd.f32 %v630, %v582
  %v632 = vadd.f32 %v631, %v583
  %v633 = vadd.f32 %v632, %v584
  %v634 = vadd.f32 %v633, %v585
  %v635 = vadd.f32 %v634, %v586
  %v636 = vadd.f32 %v635, %v587
  %v637 = vadd.f32 %v636, %v588
  %v638 = vadd.f32 %v637, %v589
  %v639 = vadd.f32 %v638, %v590
  %v640 = vadd.f32 %v639, %v591
  %v641 = vadd.f32 %v640, %v592
  %v642 = vadd.f32 %v641, %v593
  %v643 = vadd.f32 %v642, %v594
  %v644 = vadd.f32 %v643, %v595
  %v645 = vadd.f32 %v644, %v596
  %v646 = vadd.f32 %v645, %v597
  %v647 = vadd.f32 %v646, %v598
  %v648 = vadd.f32 %v647, %v599
  %v649 = vadd.f32 %v648, %v600
  %v650 = vadd.f32 %v649, %v601
  %v651 = vadd.f32 %v650, %v602
  %v652 = vadd.f32 %v651, %v603
  %v653 = vadd.f32 %v652, %v604
  %v654 = vadd.f32 %v653, %v605
  %v655 = vadd.f32 %v654, %v606
  %v656 = vadd.f32 %v655, %v607
  %v657 = vadd.f32 %v656, %v608
  %v658 = vadd.f32 %v657, %v609
  %v659 = vadd.f32 %v658, %v610
  %v660 = vadd.f32 %v659, %v611
  %v661 = vadd.f32 %v660, %v612
  %v662 = vadd.f32 %v661, %v613
  %v663 = vadd.f32 %v662, %v614
  %v664 = vadd.f32 %v663, %v615
  %v665 = vadd.f32 %v664, %v616
  %v666 = vadd.f32 %v665, %v617
  %v667 = vadd.f32 %v666, %v618
  %v668 = vadd.f32 %v667, %v619
  %v669 = vrot.slane %v668, 4
  %v670 = vadd.f32 %v668, %v669
  %v671 = vrot.slane %v670, 2
  %v672 = vadd.f32 %v670, %v671
  %v673 = vrot.slane %v672, 1
  %v674 = vadd.f32 %v672, %v673
  %v675 = vmul.f32 %v569, 0.0025510204
  %v676 = vmul.f32 %v674, 0.0025510204
  %v677 = vmul.f32 %v675, %v675
  %v678 = vsub.f32 %v676, %v677
  %v679 = vmax.f32 %v678, 0.0
  %v680 = vld [vmem:[%s2] sm:$0x1]
  %v681 = vadd.f32 %v679, 0.001
  %v682 = vrsqrt.pop %v681
  %v683 = vmul.f32 %v680, %v682
  %v684 = vld [vmem:[%s3] sm:$0x1]
  %v685 = vmul.f32 %v675, %v683
  %v686 = vsub.f32 %v684, %v685
  %v688 = vlaneseq
  %v689 = vshrl.u32 %v688, 7
  %v690 = vsub.s32 0, %v689
  %v691 = vrot.slane %v683, %v690
  %v693 = vmul.f32 %v317, %v691
  %v694 = vmul.f32 %v320, %v691
  %v695 = vmul.f32 %v325, %v691
  %v696 = vmul.f32 %v328, %v691
  %v697 = vmul.f32 %v333, %v691
  %v698 = vmul.f32 %v336, %v691
  %v699 = vmul.f32 %v341, %v691
  %v700 = vmul.f32 %v344, %v691
  %v701 = vmul.f32 %v349, %v691
  %v702 = vmul.f32 %v352, %v691
  %v703 = vmul.f32 %v357, %v691
  %v704 = vmul.f32 %v360, %v691
  %v705 = vmul.f32 %v365, %v691
  %v706 = vmul.f32 %v368, %v691
  %v707 = vmul.f32 %v373, %v691
  %v708 = vmul.f32 %v376, %v691
  %v709 = vmul.f32 %v381, %v691
  %v710 = vmul.f32 %v384, %v691
  %v711 = vmul.f32 %v389, %v691
  %v712 = vmul.f32 %v392, %v691
  %v713 = vmul.f32 %v397, %v691
  %v714 = vmul.f32 %v400, %v691
  %v715 = vmul.f32 %v405, %v691
  %v716 = vmul.f32 %v408, %v691
  %v717 = vmul.f32 %v413, %v691
  %v718 = vmul.f32 %v416, %v691
  %v719 = vmul.f32 %v421, %v691
  %v720 = vmul.f32 %v424, %v691
  %v721 = vmul.f32 %v429, %v691
  %v722 = vmul.f32 %v432, %v691
  %v723 = vmul.f32 %v437, %v691
  %v724 = vmul.f32 %v440, %v691
  %v725 = vmul.f32 %v445, %v691
  %v726 = vmul.f32 %v448, %v691
  %v727 = vmul.f32 %v453, %v691
  %v728 = vmul.f32 %v456, %v691
  %v729 = vmul.f32 %v461, %v691
  %v730 = vmul.f32 %v464, %v691
  %v731 = vmul.f32 %v469, %v691
  %v732 = vmul.f32 %v472, %v691
  %v733 = vmul.f32 %v477, %v691
  %v734 = vmul.f32 %v480, %v691
  %v735 = vmul.f32 %v485, %v691
  %v736 = vmul.f32 %v488, %v691
  %v737 = vmul.f32 %v493, %v691
  %v738 = vmul.f32 %v496, %v691
  %v739 = vmul.f32 %v501, %v691
  %v740 = vmul.f32 %v504, %v691
  %v741 = vmul.f32 %v509, %v691
  %v742 = vmul.f32 %v512, %v691
  %v744 = vlaneseq
  %v745 = vshrl.u32 %v744, 7
  %v746 = vsub.s32 0, %v745
  %v747 = vrot.slane %v686, %v746
  %v749 = vadd.f32 %v693, %v747
  %v750 = vadd.f32 %v694, %v747
  %v751 = vadd.f32 %v695, %v747
  %v752 = vadd.f32 %v696, %v747
  %v753 = vadd.f32 %v697, %v747
  %v754 = vadd.f32 %v698, %v747
  %v755 = vadd.f32 %v699, %v747
  %v756 = vadd.f32 %v700, %v747
  %v757 = vadd.f32 %v701, %v747
  %v758 = vadd.f32 %v702, %v747
  %v759 = vadd.f32 %v703, %v747
  %v760 = vadd.f32 %v704, %v747
  %v761 = vadd.f32 %v705, %v747
  %v762 = vadd.f32 %v706, %v747
  %v763 = vadd.f32 %v707, %v747
  %v764 = vadd.f32 %v708, %v747
  %v765 = vadd.f32 %v709, %v747
  %v766 = vadd.f32 %v710, %v747
  %v767 = vadd.f32 %v711, %v747
  %v768 = vadd.f32 %v712, %v747
  %v769 = vadd.f32 %v713, %v747
  %v770 = vadd.f32 %v714, %v747
  %v771 = vadd.f32 %v715, %v747
  %v772 = vadd.f32 %v716, %v747
  %v773 = vadd.f32 %v717, %v747
  %v774 = vadd.f32 %v718, %v747
  %v775 = vadd.f32 %v719, %v747
  %v776 = vadd.f32 %v720, %v747
  %v777 = vadd.f32 %v721, %v747
  %v778 = vadd.f32 %v722, %v747
  %v779 = vadd.f32 %v723, %v747
  %v780 = vadd.f32 %v724, %v747
  %v781 = vadd.f32 %v725, %v747
  %v782 = vadd.f32 %v726, %v747
  %v783 = vadd.f32 %v727, %v747
  %v784 = vadd.f32 %v728, %v747
  %v785 = vadd.f32 %v729, %v747
  %v786 = vadd.f32 %v730, %v747
  %v787 = vadd.f32 %v731, %v747
  %v788 = vadd.f32 %v732, %v747
  %v789 = vadd.f32 %v733, %v747
  %v790 = vadd.f32 %v734, %v747
  %v791 = vadd.f32 %v735, %v747
  %v792 = vadd.f32 %v736, %v747
  %v793 = vadd.f32 %v737, %v747
  %v794 = vadd.f32 %v738, %v747
  %v795 = vadd.f32 %v739, %v747
  %v796 = vadd.f32 %v740, %v747
  %v797 = vadd.f32 %v741, %v747
  %v798 = vadd.f32 %v742, %v747
  %v799 = vmax.f32 %v749, 0.0
  %v800 = vmax.f32 %v750, 0.0
  %v801 = vmax.f32 %v751, 0.0
  %v802 = vmax.f32 %v752, 0.0
  %v803 = vmax.f32 %v753, 0.0
  %v804 = vmax.f32 %v754, 0.0
  %v805 = vmax.f32 %v755, 0.0
  %v806 = vmax.f32 %v756, 0.0
  %v807 = vmax.f32 %v757, 0.0
  %v808 = vmax.f32 %v758, 0.0
  %v809 = vmax.f32 %v759, 0.0
  %v810 = vmax.f32 %v760, 0.0
  %v811 = vmax.f32 %v761, 0.0
  %v812 = vmax.f32 %v762, 0.0
  %v813 = vmax.f32 %v763, 0.0
  %v814 = vmax.f32 %v764, 0.0
  %v815 = vmax.f32 %v765, 0.0
  %v816 = vmax.f32 %v766, 0.0
  %v817 = vmax.f32 %v767, 0.0
  %v818 = vmax.f32 %v768, 0.0
  %v819 = vmax.f32 %v769, 0.0
  %v820 = vmax.f32 %v770, 0.0
  %v821 = vmax.f32 %v771, 0.0
  %v822 = vmax.f32 %v772, 0.0
  %v823 = vmax.f32 %v773, 0.0
  %v824 = vmax.f32 %v774, 0.0
  %v825 = vmax.f32 %v775, 0.0
  %v826 = vmax.f32 %v776, 0.0
  %v827 = vmax.f32 %v777, 0.0
  %v828 = vmax.f32 %v778, 0.0
  %v829 = vmax.f32 %v779, 0.0
  %v830 = vmax.f32 %v780, 0.0
  %v831 = vmax.f32 %v781, 0.0
  %v832 = vmax.f32 %v782, 0.0
  %v833 = vmax.f32 %v783, 0.0
  %v834 = vmax.f32 %v784, 0.0
  %v835 = vmax.f32 %v785, 0.0
  %v836 = vmax.f32 %v786, 0.0
  %v837 = vmax.f32 %v787, 0.0
  %v838 = vmax.f32 %v788, 0.0
  %v839 = vmax.f32 %v789, 0.0
  %v840 = vmax.f32 %v790, 0.0
  %v841 = vmax.f32 %v791, 0.0
  %v842 = vmax.f32 %v792, 0.0
  %v843 = vmax.f32 %v793, 0.0
  %v844 = vmax.f32 %v794, 0.0
  %v845 = vmax.f32 %v795, 0.0
  %v846 = vmax.f32 %v796, 0.0
  %v847 = vmax.f32 %v797, 0.0
  %v848 = vmax.f32 %v798, 0.0
  %849 = vst [vmem:[%s4] sm:$0xff] %v799
  %850 = vst [vmem:[%s4 + $0x8] sm:$0xff] %v800
  %851 = vst [vmem:[%s4 + $0x10] sm:$0xff] %v801
  %852 = vst [vmem:[%s4 + $0x18] sm:$0xff] %v802
  %853 = vst [vmem:[%s4 + $0x20] sm:$0xff] %v803
  %854 = vst [vmem:[%s4 + $0x28] sm:$0xff] %v804
  %855 = vst [vmem:[%s4 + $0x30] sm:$0xff] %v805
  %856 = vst [vmem:[%s4 + $0x38] sm:$0xff] %v806
  %857 = vst [vmem:[%s4 + $0x40] sm:$0xff] %v807
  %858 = vst [vmem:[%s4 + $0x48] sm:$0xff] %v808
  %859 = vst [vmem:[%s4 + $0x50] sm:$0xff] %v809
  %860 = vst [vmem:[%s4 + $0x58] sm:$0xff] %v810
  %861 = vst [vmem:[%s4 + $0x60] sm:$0xff] %v811
  %862 = vst [vmem:[%s4 + $0x68] sm:$0xff] %v812
  %863 = vst [vmem:[%s4 + $0x70] sm:$0xff] %v813
  %864 = vst [vmem:[%s4 + $0x78] sm:$0xff] %v814
  %865 = vst [vmem:[%s4 + $0x80] sm:$0xff] %v815
  %866 = vst [vmem:[%s4 + $0x88] sm:$0xff] %v816
  %867 = vst [vmem:[%s4 + $0x90] sm:$0xff] %v817
  %868 = vst [vmem:[%s4 + $0x98] sm:$0xff] %v818
  %869 = vst [vmem:[%s4 + $0xa0] sm:$0xff] %v819
  %870 = vst [vmem:[%s4 + $0xa8] sm:$0xff] %v820
  %871 = vst [vmem:[%s4 + $0xb0] sm:$0xff] %v821
  %872 = vst [vmem:[%s4 + $0xb8] sm:$0xff] %v822
  %873 = vst [vmem:[%s4 + $0xc0] sm:$0xff] %v823
  %874 = vst [vmem:[%s4 + $0xc8] sm:$0xff] %v824
  %875 = vst [vmem:[%s4 + $0xd0] sm:$0xff] %v825
  %876 = vst [vmem:[%s4 + $0xd8] sm:$0xff] %v826
  %877 = vst [vmem:[%s4 + $0xe0] sm:$0xff] %v827
  %878 = vst [vmem:[%s4 + $0xe8] sm:$0xff] %v828
  %879 = vst [vmem:[%s4 + $0xf0] sm:$0xff] %v829
  %880 = vst [vmem:[%s4 + $0xf8] sm:$0xff] %v830
  %881 = vst [vmem:[%s4 + $0x100] sm:$0xff] %v831
  %882 = vst [vmem:[%s4 + $0x108] sm:$0xff] %v832
  %883 = vst [vmem:[%s4 + $0x110] sm:$0xff] %v833
  %884 = vst [vmem:[%s4 + $0x118] sm:$0xff] %v834
  %885 = vst [vmem:[%s4 + $0x120] sm:$0xff] %v835
  %886 = vst [vmem:[%s4 + $0x128] sm:$0xff] %v836
  %887 = vst [vmem:[%s4 + $0x130] sm:$0xff] %v837
  %888 = vst [vmem:[%s4 + $0x138] sm:$0xff] %v838
  %889 = vst [vmem:[%s4 + $0x140] sm:$0xff] %v839
  %890 = vst [vmem:[%s4 + $0x148] sm:$0xff] %v840
  %891 = vst [vmem:[%s4 + $0x150] sm:$0xff] %v841
  %892 = vst [vmem:[%s4 + $0x158] sm:$0xff] %v842
  %893 = vst [vmem:[%s4 + $0x160] sm:$0xff] %v843
  %894 = vst [vmem:[%s4 + $0x168] sm:$0xff] %v844
  %895 = vst [vmem:[%s4 + $0x170] sm:$0xff] %v845
  %896 = vst [vmem:[%s4 + $0x178] sm:$0xff] %v846
  %897 = vst [vmem:[%s4 + $0x180] sm:$0xff] %v847
  %898 = vst [vmem:[%s4 + $0x188] sm:$0xff] %v848
  // Predicated region
  $region18: #{basic_conv2d_layer.1} parent=0 // pred_check
    _
  $region19: #{basic_conv2d_layer.1} parent=0 // pred_check_branch
    %900 = sbr.rel (0) target = $region21
  $region20: #{basic_conv2d_layer.1} parent=0 // pred_region
    _
  $region21: #{basic_conv2d_layer.1} parent=0 // pred_fallthru
    _
  // Predicated region
  $region22: #{basic_conv2d_layer.1} parent=0 // pred_check
    _
  $region23: #{basic_conv2d_layer.1} parent=0 // pred_check_branch
    %902 = sbr.rel (0) target = $region25
  $region24: #{basic_conv2d_layer.1} parent=0 // pred_region
    _
  $region25: #{basic_conv2d_layer.1} parent=0 // pred_fallthru
    _

</llo_original>
